<compile_context>
chip_gen: v5e
topology: v5e:2x2
jax: 0.10.0
libtpu: 0.0.40
codegen_flags: <defaults>
</compile_context>

<pallas_src>
import jax
import jax.numpy as jnp
from jax.experimental import pallas as pl
from jax.experimental.pallas import tpu as pltpu


def _round_up(x, m):
    return (x + m - 1) // m * m


def _matmul_bias_kernel(x_ref, w_ref, b_ref, o_ref):
    # One (TM, C) x (C, Nout) MXU pass per grid step, f32 accumulation.
    o_ref[...] = (
        jnp.dot(x_ref[...], w_ref[...], preferred_element_type=jnp.float32)
        + b_ref[...]
    ).astype(o_ref.dtype)


def _tiled_linear(x2, w, b, *, tm=256):
    """out[M, Nout] = x2[M, C] @ w[C, Nout] + b[1, Nout], tiled over M."""
    M, C = x2.shape
    n_out = w.shape[1]

    # Lane-dense output: pad the output columns to a multiple of 128.
    n_pad = _round_up(n_out, 128)
    if n_pad != n_out:
        w = jnp.pad(w, ((0, 0), (0, n_pad - n_out)))
        b = jnp.pad(b, ((0, 0), (0, n_pad - n_out)))

    # Row tile: TM rows per grid step (multiple of 8 for f32 sublane tiling).
    # TM=256 fits comfortably inside v7x's 32 MiB scoped VMEM budget:
    # 2*(TM*C) + 2*(TM*n_pad) + (C*n_pad) f32 for typical C / inner_dim.
    tm_eff = tm if M >= tm else _round_up(M, 8)
    m_pad = _round_up(M, tm_eff)
    if m_pad != M:
        x2 = jnp.pad(x2, ((0, m_pad - M), (0, 0)))

    out = pl.pallas_call(
        _matmul_bias_kernel,
        out_shape=jax.ShapeDtypeStruct((m_pad, n_pad), x2.dtype),
        grid=(m_pad // tm_eff,),
        in_specs=[
            pl.BlockSpec((tm_eff, C), lambda i: (i, 0)),   # streamed activation tile
            pl.BlockSpec((C, n_pad), lambda i: (0, 0)),    # weights: VMEM-resident
            pl.BlockSpec((1, n_pad), lambda i: (0, 0)),    # bias: VMEM-resident
        ],
        out_specs=pl.BlockSpec((tm_eff, n_pad), lambda i: (i, 0)),
        compiler_params=pltpu.CompilerParams(
            dimension_semantics=("parallel",),
        ),
    )(x2, w, b)
    return out[:M, :n_out]


def linear_projection(x, wq, bq, wkv, bkv, heads, attn_kv=None, *, tm=256):
    """Pallas implementation of LinearProjection.forward.

    x: (B, N, C); attn_kv: optional (N_kv, C) (shared across the batch, like
    the PyTorch module's unsqueeze(0).repeat(B, 1, 1)).
    Returns q: (B, heads, N, dh), k, v: (B, heads, N_kv, dh), dh = C // heads.
    """
    B, N, C = x.shape
    inner_dim = wq.shape[1]
    dh = C // heads
    x2 = x.reshape(B * N, C)

    # NOTE: cast x2 / weights to bfloat16 here (keeping f32 accumulation in the
    # kernel) for ~2x on v6e/v7x when the model tolerates it; kept f32 so the
    # demo matches the PyTorch reference tightly.
    if attn_kv is None:
        # Fused q+kv projection: one pass over x, one lane-dense output slab.
        w = jnp.concatenate([wq, wkv], axis=1)     # (C, 3*inner_dim)
        b = jnp.concatenate([bq, bkv], axis=1)     # (1, 3*inner_dim)
        out = _tiled_linear(x2, w, b, tm=tm)
        q_flat = out[:, :inner_dim]
        kv_flat = out[:, inner_dim:]
        # Mirror torch: reshape(B,N,1,h,dh).permute(2,0,3,1,4)[0] -> (B,h,N,dh)
        q = q_flat.reshape(B, N, heads, dh).transpose(0, 2, 1, 3)
        # reshape(B,N,2,h,dh).permute(2,0,3,1,4) -> (2,B,h,N,dh)
        kv = kv_flat.reshape(B, N, 2, heads, dh).transpose(2, 0, 3, 1, 4)
        k, v = kv[0], kv[1]
    else:
        # kv rows are identical for every batch element: project the (N_kv, C)
        # rows ONCE and broadcast across batch in the reshape glue instead of
        # materializing a B-times replicated copy in HBM.
        N_kv = attn_kv.shape[0]
        q_flat = _tiled_linear(x2, wq, bq, tm=tm)
        kv_flat = _tiled_linear(attn_kv, wkv, bkv, tm=tm)
        q = q_flat.reshape(B, N, heads, dh).transpose(0, 2, 1, 3)
        kv = kv_flat.reshape(N_kv, 2, heads, dh).transpose(1, 2, 0, 3)  # (2,h,N_kv,dh)
        kv = jnp.broadcast_to(kv[:, None], (2, B, heads, N_kv, dh))
        k, v = kv[0], kv[1]
    # TODO(synk): emit q/k/v directly in (B, heads, N, dh) blocks via the
    # out_spec index_map to drop the post-kernel transpose HBM pass.
    return q, k, v


def init_params(key, dim, heads=8, dim_head=64, bias=True):
    """Deterministic PyTorch-style (uniform +-1/sqrt(fan_in)) init."""
    inner_dim = dim_head * heads
    k = 1.0 / (dim ** 0.5)
    k1, k2, k3, k4 = jax.random.split(key, 4)
    # Stored already transposed relative to nn.Linear.weight: (in, out).
    wq = jax.random.uniform(k1, (dim, inner_dim), jnp.float32, -k, k)
    wkv = jax.random.uniform(k2, (dim, 2 * inner_dim), jnp.float32, -k, k)
    if bias:
        bq = jax.random.uniform(k3, (1, inner_dim), jnp.float32, -k, k)
        bkv = jax.random.uniform(k4, (1, 2 * inner_dim), jnp.float32, -k, k)
    else:
        bq = jnp.zeros((1, inner_dim), jnp.float32)
        bkv = jnp.zeros((1, 2 * inner_dim), jnp.float32)
    return wq, bq, wkv, bkv


if __name__ == "__main__":
    # Small shapes consistent with the module: the PyTorch reshape requires
    # inner_dim == heads * (C // heads), i.e. dim_head = C // heads.
    B, N, heads, dim_head = 2, 8, 8, 4
    dim = heads * dim_head  # C = 32, inner_dim = 32

    key = jax.random.PRNGKey(0)
    kx, kp, kkv = jax.random.split(key, 3)
    x = jax.random.normal(kx, (B, N, dim), jnp.float32)
    wq, bq, wkv, bkv = init_params(kp, dim, heads=heads, dim_head=dim_head, bias=True)

    # --- self-attention path (attn_kv=None): fused q+kv GEMM ------------------
    q, k, v = linear_projection(x, wq, bq, wkv, bkv, heads)
    jax.block_until_ready((q, k, v))

    dh = dim // heads
    q_ref = (x.reshape(B * N, dim) @ wq + bq).reshape(B, N, 1, heads, dh)
    q_ref = q_ref.transpose(2, 0, 3, 1, 4)[0]
    kv_ref = (x.reshape(B * N, dim) @ wkv + bkv).reshape(B, N, 2, heads, dh)
    kv_ref = kv_ref.transpose(2, 0, 3, 1, 4)
    assert q.shape == (B, heads, N, dh)
    assert jnp.allclose(q, q_ref, atol=1e-5)
    assert jnp.allclose(k, kv_ref[0], atol=1e-5)
    assert jnp.allclose(v, kv_ref[1], atol=1e-5)

    # --- cross-attention path (attn_kv given, shared across batch) ------------
    N_kv = 16
    attn_kv = jax.random.normal(kkv, (N_kv, dim), jnp.float32)
    q2, k2, v2 = linear_projection(x, wq, bq, wkv, bkv, heads, attn_kv=attn_kv)
    jax.block_until_ready((q2, k2, v2))

    akv_b = jnp.broadcast_to(attn_kv[None], (B, N_kv, dim))
    kv2_ref = (akv_b.reshape(B * N_kv, dim) @ wkv + bkv).reshape(B, N_kv, 2, heads, dh)
    kv2_ref = kv2_ref.transpose(2, 0, 3, 1, 4)
    assert jnp.allclose(q2, q_ref, atol=1e-5)
    assert jnp.allclose(k2, kv2_ref[0], atol=1e-5)
    assert jnp.allclose(v2, kv2_ref[1], atol=1e-5)
    assert k2.shape == (B, heads, N_kv, dh) and v2.shape == (B, heads, N_kv, dh)

    print("KERNEL_OK")
</pallas_src>

<mosaic_0001>
module attributes {stable_mosaic.version = 11 : i64} {
  func.func @_matmul_bias_kernel(%arg0: i32, %arg1: memref<16x32xf32, #tpu.memory_space<vmem>>, %arg2: memref<32x128xf32, #tpu.memory_space<vmem>>, %arg3: memref<1x128xf32, #tpu.memory_space<vmem>>, %arg4: memref<16x128xf32, #tpu.memory_space<vmem>>) attributes {dimension_semantics = [#tpu.dimension_semantics<parallel>], iteration_bounds = array<i64: 1>, scalar_prefetch = 0 : i64, scratch_operands = 0 : i64, tpu.core_type = #tpu.core_type<tc>, window_params = [{transform_indices = @transform_0, window_bounds = array<i64: 16, 32>}, {pipeline_mode = #tpu.pipeline_mode<synchronous>, transform_indices = @transform_1, window_bounds = array<i64: 32, 128>}, {pipeline_mode = #tpu.pipeline_mode<synchronous>, transform_indices = @transform_2, window_bounds = array<i64: 1, 128>}, {transform_indices = @transform_3, window_bounds = array<i64: 16, 128>}]} {
    %c0 = arith.constant 0 : index
    %c0_0 = arith.constant 0 : index
    %0 = vector.load %arg1[%c0, %c0_0] : memref<16x32xf32, #tpu.memory_space<vmem>>, vector<16x32xf32>
    %c0_1 = arith.constant 0 : index
    %c0_2 = arith.constant 0 : index
    %1 = vector.load %arg2[%c0_1, %c0_2] : memref<32x128xf32, #tpu.memory_space<vmem>>, vector<32x128xf32>
    %cst = arith.constant dense<0.000000e+00> : vector<16x128xf32>
    %2 = tpu.matmul %0, %1, %cst {dimension_numbers = #tpu.dot_dimension_numbers<[1], [0], [0], [1], [0, 0, 1, 1], [], []>} : vector<16x32xf32>, vector<32x128xf32>, vector<16x128xf32> -> vector<16x128xf32>
    %c0_3 = arith.constant 0 : index
    %c0_4 = arith.constant 0 : index
    %3 = vector.load %arg3[%c0_3, %c0_4] : memref<1x128xf32, #tpu.memory_space<vmem>>, vector<1x128xf32>
    %4 = vector.broadcast %3 : vector<1x128xf32> to vector<16x128xf32>
    %5 = arith.addf %2, %4 : vector<16x128xf32>
    %c0_5 = arith.constant 0 : index
    %c0_6 = arith.constant 0 : index
    %6 = vector.load %arg4[%c0_5, %c0_6] : memref<16x128xf32, #tpu.memory_space<vmem>>, vector<16x128xf32>
    tpu.vector_store %arg4[%c0_5, %c0_6], %5 {strides = array<i32>} : memref<16x128xf32, #tpu.memory_space<vmem>>, vector<16x128xf32>,
    return
  }
  func.func @transform_0(%arg0: i32) -> (i32, i32) {
    %c0_i32 = arith.constant 0 : i32
    %c0_i32_0 = arith.constant 0 : i32
    return %arg0, %c0_i32 : i32, i32
  }
  func.func @transform_1(%arg0: i32) -> (i32, i32) {
    %c0_i32 = arith.constant 0 : i32
    %c0_i32_0 = arith.constant 0 : i32
    %c0_i32_1 = arith.constant 0 : i32
    return %c0_i32, %c0_i32_0 : i32, i32
  }
  func.func @transform_2(%arg0: i32) -> (i32, i32) {
    %c0_i32 = arith.constant 0 : i32
    %c0_i32_0 = arith.constant 0 : i32
    %c0_i32_1 = arith.constant 0 : i32
    return %c0_i32, %c0_i32_0 : i32, i32
  }
  func.func @transform_3(%arg0: i32) -> (i32, i32) {
    %c0_i32 = arith.constant 0 : i32
    %c0_i32_0 = arith.constant 0 : i32
    return %arg0, %c0_i32 : i32, i32
  }
}

</mosaic_0001>

<llo_original>
// kernel: tpu_custom_call.1
$region0: #{tpu_custom_call.1}
  #allocation0 [shape = 'u32[]', space=smem, size = 0x4, offset = 0x4, fixed_abs, tag = 'smem constant byte address 0x4 - core index']
  #allocation1 [shape = 'u32[72,128]{1,0:T(1,128)}', space=vmem, size = 0x9000, scoped, tag = 'internal scratch']
  %s0 = inlined_call_operand.hbm [shape: f32[16,32], index: 0, kind: input, shape index: {}]
  %s1 = inlined_call_operand.hbm [shape: f32[32,128], index: 1, kind: input, shape index: {}]
  %s2 = inlined_call_operand.vmem [shape: f32[1,128], index: 2, kind: input, shape index: {}]
  %s3 = inlined_call_operand.hbm [shape: f32[16,128], index: 3, kind: output, shape index: {}]
  %s4 = sld [smem:[#allocation0]]
  $region30: #{tpu_custom_call.1} parent=0
    _
  %s6 = ssub.s32 1, %s4
  %s7 = scalar_select 0, %s6, %s4
  $region1: #{tpu_custom_call.1} parent=0
    #allocation2 [shape = 'u8[8192]{0}', space=vmem, size = 0x2000, scoped, tag = 'input window, operand 0, single buffered']
    #allocation3 [shape = 's32[1]{0}', space=sflag, size = 0x4, scoped, tag = 'scoped memory for tpu_custom_call.1']
    #allocation4 [shape = 's32[1]{0}', space=sflag, size = 0x4, scoped, tag = 'scoped memory for tpu_custom_call.1']
    #allocation5 [shape = 'u8[16384]{0}', space=vmem, size = 0x4000, scoped, tag = 'input window, operand 1, single buffered']
    #allocation6 [shape = 's32[1]{0}', space=sflag, size = 0x4, scoped, tag = 'scoped memory for tpu_custom_call.1']
    #allocation7 [shape = 'u8[8192]{0}', space=vmem, size = 0x2000, scoped, tag = 'output window, operand 0, single buffered']
    %8 = vsyncpa [#allocation3], 0
    %9 = vsyncpa [#allocation6], 0
    %10 = vsyncpa [#allocation4], 0
    // Predicated region
    $region2: #{tpu_custom_call.1} parent=1 // pred_check
      _
    $region3: #{tpu_custom_call.1} parent=1 // pred_check_branch
      %12 = sbr.rel (0) target = $region5
    $region4: #{tpu_custom_call.1} parent=1 // pred_region
      %14 = vsyncadd [#allocation3], 0
      %s15 = sshll.u32 %s0, 4
      %s16 = int_to_ptr.hbm [resolvable:$true] %s15
      %s17 = sshll.u32 [#allocation2], 4
      %s18 = int_to_ptr.vmem [resolvable:$true] %s17
      %23 = dma.hbm_to_vmem [thread:$0]  %s16, 256, %s18, [#allocation3], 128, 128, 8
    $region5: #{tpu_custom_call.1} parent=1 // pred_fallthru
      _
    // Predicated region
    $region6: #{tpu_custom_call.1} parent=1 // pred_check
      _
    $region7: #{tpu_custom_call.1} parent=1 // pred_check_branch
      %25 = sbr.rel (0) target = $region9
    $region8: #{tpu_custom_call.1} parent=1 // pred_region
      %27 = vsyncadd [#allocation6], 0
      %s28 = sshll.u32 %s1, 4
      %s29 = int_to_ptr.hbm [resolvable:$true] %s28
      %s30 = sshll.u32 [#allocation5], 4
      %s31 = int_to_ptr.vmem [resolvable:$true] %s30
      %36 = dma.hbm_to_vmem [thread:$0]  %s29, 512, %s31, [#allocation6], 128, 128, 8
    $region9: #{tpu_custom_call.1} parent=1 // pred_fallthru
      _
    // Predicated region
    $region10: #{tpu_custom_call.1} parent=1 // pred_check
      _
    $region11: #{tpu_custom_call.1} parent=1 // pred_check_branch
      %38 = sbr.rel (0) target = $region13
    $region12: #{tpu_custom_call.1} parent=1 // pred_region
      _
    $region13: #{tpu_custom_call.1} parent=1 // pred_fallthru
      _
    // Predicated region
    $region14: #{tpu_custom_call.1} parent=1 // pred_check
      _
    $region15: #{tpu_custom_call.1} parent=1 // pred_check_branch
      %40 = sbr.rel (0) target = $region17
    $region16: #{tpu_custom_call.1} parent=1 // pred_region
      %42 = dma.done [#allocation3], 256
    $region17: #{tpu_custom_call.1} parent=1 // pred_fallthru
      _
    // Predicated region
    $region18: #{tpu_custom_call.1} parent=1 // pred_check
      _
    $region19: #{tpu_custom_call.1} parent=1 // pred_check_branch
      %44 = sbr.rel (0) target = $region21
    $region20: #{tpu_custom_call.1} parent=1 // pred_region
      %46 = dma.done [#allocation6], 512
    $region21: #{tpu_custom_call.1} parent=1 // pred_fallthru
      _
    %v47 = vld [vmem:[#allocation2] sm:$0xff]
    %v48 = vld [vmem:[#allocation2 + $0x8] sm:$0xff]
    %v49 = vld [vmem:[#allocation5] sm:$0xff]
    %v50 = vld [vmem:[#allocation5 + $0x8] sm:$0xff]
    %v51 = vld [vmem:[#allocation5 + $0x10] sm:$0xff]
    %v52 = vld [vmem:[#allocation5 + $0x18] sm:$0xff]
    %v53 = vld [vmem:[%s2] sm:$0x1]
    %v55 = vperm.slane %v53, 0
    %vm57 = vcmask 261120
    %v59 = vsel %vm57, %v47, 0
    %v62 = vsel %vm57, %v48, 0
    %64 = vmatpush.msra.mxu0 0.0
    %65 = vmatpush.msra.mxu0 0.0
    %66 = vmatpush.msra.mxu0 0.0
    %67 = vmatpush.msra.mxu0 0.0
    %68 = vmatpush.msra.mxu0 0.0
    %69 = vmatpush.msra.mxu0 0.0
    %70 = vmatpush.msra.mxu0 0.0
    %71 = vmatpush.msra.mxu0 0.0
    %72 = vmatpush.msra.mxu0 0.0
    %73 = vmatpush.msra.mxu0 0.0
    %74 = vmatpush.msra.mxu0 0.0
    %75 = vmatpush.msra.mxu0 0.0
    %76 = vmatpush.msra.mxu0 %v52
    %77 = vmatpush.msra.mxu0 %v51
    %78 = vmatpush.msra.mxu0 %v50
    %79 = vmatpush.msra.mxu0 %v49
    %80 = vmatmul.f32.gmra.mxu0 %v59
    %v81 = vpop.f32.mrf.mxu0
    %v82 = vadd.f32 %v55, %v81
    %83 = vmatmul.f32.gmra.mxu0 %v62
    %v84 = vpop.f32.mrf.mxu0
    %v85 = vadd.f32 %v55, %v84
    %86 = vdwg.mxu0
    %87 = vst [vmem:[#allocation7] sm:$0xff] %v82
    %88 = vst [vmem:[#allocation7 + $0x8] sm:$0xff] %v85
    // Predicated region
    $region22: #{tpu_custom_call.1} parent=1 // pred_check
      _
    $region23: #{tpu_custom_call.1} parent=1 // pred_check_branch
      %90 = sbr.rel (0) target = $region25
    $region24: #{tpu_custom_call.1} parent=1 // pred_region
      %92 = vsyncadd [#allocation4], 0
      %s93 = sshll.u32 [#allocation7], 4
      %s94 = int_to_ptr.vmem [resolvable:$true] %s93
      %s95 = sshll.u32 %s3, 4
      %s96 = int_to_ptr.hbm [resolvable:$true] %s95
      %101 = dma.vmem_to_hbm [thread:$0]  %s94, 256, %s96, [#allocation4], 128, 128, 8
    $region25: #{tpu_custom_call.1} parent=1 // pred_fallthru
      _
    // Predicated region
    $region26: #{tpu_custom_call.1} parent=1 // pred_check
      _
    $region27: #{tpu_custom_call.1} parent=1 // pred_check_branch
      %103 = sbr.rel (0) target = $region29
    $region28: #{tpu_custom_call.1} parent=1 // pred_region
      %105 = dma.done [#allocation4], 256
    $region29: #{tpu_custom_call.1} parent=1 // pred_fallthru
      _
    %106 = vsyncpa [#allocation3], 1
    %107 = vsyncpa [#allocation6], 1
    %108 = vsyncpa [#allocation4], 1

</llo_original>
